<compile_context>
chip_gen: v7x
topology: tpu7x:2x2x1
jax: 0.10.0
libtpu: 0.0.40
codegen_flags: <defaults>
</compile_context>

<pallas_src>
import functools

import jax
import jax.numpy as jnp
from jax.experimental import pallas as pl
from jax.experimental.pallas import tpu as pltpu


def _conv_lrelu_kernel(p_ref, w_ref, b_ref, o_ref, *, neg_slope):
    """One batch element per grid step.

    p_ref: (1, K*K*Cin, H*W)  im2col patches (VMEM), lane-dense minor dim
    w_ref: (Cout, K*K*Cin)    weights, tap-major / Cin-minor (VMEM)
    b_ref: (Cout, 1)          bias (VMEM)
    o_ref: (1, Cout, H*W)     output tile == flattened NCHW (VMEM)
    """
    # Single MXU matmul with K*K*Cin reduction dim, f32 accumulation.
    acc = jnp.dot(w_ref[...], p_ref[0],
                  preferred_element_type=jnp.float32)          # (Cout, H*W)
    acc = acc + b_ref[...]                                      # broadcast over lanes
    act = jnp.maximum(acc, neg_slope * acc)                     # LeakyReLU(0.2)
    o_ref[...] = act[None].astype(o_ref.dtype)


def input_conv_forward(x_nchw, weight, bias, *, neg_slope=0.2):
    """Forward pass of InputConv.

    x_nchw: (N, Cin, H, W)    float32
    weight: (Cout, Cin, K, K) float32  (PyTorch Conv2d layout)
    bias:   (Cout,)           float32
    returns (N, Cout, H, W)   float32
    """
    N, Cin, H, W = x_nchw.shape
    Cout, _, K, _ = weight.shape
    assert K % 2 == 1, "only odd kernel sizes (symmetric 'same' padding) supported"
    pad = K // 2
    HW = H * W
    KKC = K * K * Cin

    # ---- single fused pad + im2col pass (one XLA fusion, lane-dense output) ----
    x_pad = jnp.pad(x_nchw, ((0, 0), (0, 0), (pad, pad), (pad, pad)))
    slabs = [x_pad[:, :, kh:kh + H, kw:kw + W]
             for kh in range(K) for kw in range(K)]             # each (N, Cin, H, W)
    patches = jnp.stack(slabs, axis=1).reshape(N, KKC, HW)      # (N, K*K*Cin, H*W)

    # Weight as (Cout, K*K*Cin), tap-major / Cin-minor to match patch ordering.
    w_cm = jnp.transpose(weight, (0, 2, 3, 1)).reshape(Cout, KKC)
    b2d = bias.reshape(Cout, 1)

    kernel = functools.partial(_conv_lrelu_kernel, neg_slope=neg_slope)

    out_flat = pl.pallas_call(
        kernel,
        out_shape=jax.ShapeDtypeStruct((N, Cout, HW), x_nchw.dtype),
        grid_spec=pltpu.PrefetchScalarGridSpec(
            num_scalar_prefetch=0,
            grid=(N,),
            in_specs=[
                pl.BlockSpec((1, KKC, HW), lambda n: (n, 0, 0)),
                pl.BlockSpec((Cout, KKC), lambda n: (0, 0)),
                pl.BlockSpec((Cout, 1), lambda n: (0, 0)),
            ],
            out_specs=pl.BlockSpec((1, Cout, HW), lambda n: (n, 0, 0)),
        ),
        compiler_params=pltpu.CompilerParams(
            dimension_semantics=("parallel",)),
    )(patches, w_cm, b2d)

    # (N, Cout, H*W) is already NCHW memory order -> free reshape, no transpose.
    return out_flat.reshape(N, Cout, H, W)


def _reference(x_nchw, weight, bias, neg_slope=0.2):
    """Pure-JAX reference (lax conv) for correctness checking."""
    out = jax.lax.conv_general_dilated(
        x_nchw, weight, window_strides=(1, 1), padding="SAME",
        dimension_numbers=("NCHW", "OIHW", "NCHW"))
    out = out + bias.reshape(1, -1, 1, 1)
    return jnp.where(out >= 0, out, neg_slope * out)


if __name__ == "__main__":
    # Shapes consistent with InputConv(in_channels=4, hidden_channels=32, kernel_size=3)
    N, Cin, H, W = 2, 4, 16, 16
    Cout, K = 32, 3

    key = jax.random.PRNGKey(0)
    kx, kw, kb = jax.random.split(key, 3)
    x = jax.random.normal(kx, (N, Cin, H, W), dtype=jnp.float32)
    # Deterministic synthetic parameters (PyTorch-like uniform scale).
    fan_in = Cin * K * K
    bound = 1.0 / (fan_in ** 0.5)
    weight = jax.random.uniform(kw, (Cout, Cin, K, K), jnp.float32, -bound, bound)
    bias = jax.random.uniform(kb, (Cout,), jnp.float32, -bound, bound)

    out = input_conv_forward(x, weight, bias)
    out = jax.block_until_ready(out)

    ref = jax.block_until_ready(_reference(x, weight, bias))
    assert out.shape == (N, Cout, H, W)
    assert jnp.allclose(out, ref, atol=1e-5, rtol=1e-5), "mismatch vs reference"

    print("KERNEL_OK")
</pallas_src>

<mosaic_0001>
module attributes {stable_mosaic.version = 11 : i64} {
  func.func @_conv_lrelu_kernel(%arg0: i32, %arg1: memref<1x36x256xf32, #tpu.memory_space<vmem>>, %arg2: memref<32x36xf32, #tpu.memory_space<vmem>>, %arg3: memref<32x1xf32, #tpu.memory_space<vmem>>, %arg4: memref<1x32x256xf32, #tpu.memory_space<vmem>>) attributes {dimension_semantics = [#tpu.dimension_semantics<parallel>], iteration_bounds = array<i64: 2>, scalar_prefetch = 0 : i64, scratch_operands = 0 : i64, tpu.core_type = #tpu.core_type<tc>, window_params = [{transform_indices = @transform_0, window_bounds = array<i64: 1, 36, 256>}, {pipeline_mode = #tpu.pipeline_mode<synchronous>, transform_indices = @transform_1, window_bounds = array<i64: 32, 36>}, {pipeline_mode = #tpu.pipeline_mode<synchronous>, transform_indices = @transform_2, window_bounds = array<i64: 32, 1>}, {transform_indices = @transform_3, window_bounds = array<i64: 1, 32, 256>}]} {
    %c0 = arith.constant 0 : index
    %c0_0 = arith.constant 0 : index
    %0 = vector.load %arg2[%c0, %c0_0] : memref<32x36xf32, #tpu.memory_space<vmem>>, vector<32x36xf32>
    %c0_1 = arith.constant 0 : index
    %c0_2 = arith.constant 0 : index
    %c0_3 = arith.constant 0 : index
    %1 = vector.load %arg1[%c0_1, %c0_2, %c0_3] : memref<1x36x256xf32, #tpu.memory_space<vmem>>, vector<1x36x256xf32>
    %2 = vector.shape_cast %1 : vector<1x36x256xf32> to vector<36x256xf32>
    %cst = arith.constant dense<0.000000e+00> : vector<32x256xf32>
    %3 = tpu.matmul %0, %2, %cst {dimension_numbers = #tpu.dot_dimension_numbers<[1], [0], [0], [1], [0, 0, 1, 1], [], []>} : vector<32x36xf32>, vector<36x256xf32>, vector<32x256xf32> -> vector<32x256xf32>
    %c0_4 = arith.constant 0 : index
    %c0_5 = arith.constant 0 : index
    %4 = vector.load %arg3[%c0_4, %c0_5] : memref<32x1xf32, #tpu.memory_space<vmem>>, vector<32x1xf32>
    %5 = vector.broadcast %4 : vector<32x1xf32> to vector<32x256xf32>
    %6 = arith.addf %3, %5 : vector<32x256xf32>
    %cst_6 = arith.constant 2.000000e-01 : f32
    %7 = vector.broadcast %cst_6 : f32 to vector<32x256xf32>
    %8 = arith.mulf %7, %6 : vector<32x256xf32>
    %9 = arith.maximumf %6, %8 : vector<32x256xf32>
    %10 = vector.shape_cast %9 : vector<32x256xf32> to vector<1x32x256xf32>
    %c0_7 = arith.constant 0 : index
    %c0_8 = arith.constant 0 : index
    %c0_9 = arith.constant 0 : index
    %11 = vector.load %arg4[%c0_7, %c0_8, %c0_9] : memref<1x32x256xf32, #tpu.memory_space<vmem>>, vector<1x32x256xf32>
    tpu.vector_store %arg4[%c0_7, %c0_8, %c0_9], %10 {strides = array<i32>} : memref<1x32x256xf32, #tpu.memory_space<vmem>>, vector<1x32x256xf32>,
    return
  }
  func.func @transform_0(%arg0: i32) -> (i32, i32, i32) {
    %c0_i32 = arith.constant 0 : i32
    %c0_i32_0 = arith.constant 0 : i32
    %c0_i32_1 = arith.constant 0 : i32
    return %arg0, %c0_i32, %c0_i32_0 : i32, i32, i32
  }
  func.func @transform_1(%arg0: i32) -> (i32, i32) {
    %c0_i32 = arith.constant 0 : i32
    %c0_i32_0 = arith.constant 0 : i32
    %c0_i32_1 = arith.constant 0 : i32
    return %c0_i32, %c0_i32_0 : i32, i32
  }
  func.func @transform_2(%arg0: i32) -> (i32, i32) {
    %c0_i32 = arith.constant 0 : i32
    %c0_i32_0 = arith.constant 0 : i32
    %c0_i32_1 = arith.constant 0 : i32
    return %c0_i32, %c0_i32_0 : i32, i32
  }
  func.func @transform_3(%arg0: i32) -> (i32, i32, i32) {
    %c0_i32 = arith.constant 0 : i32
    %c0_i32_0 = arith.constant 0 : i32
    %c0_i32_1 = arith.constant 0 : i32
    return %arg0, %c0_i32, %c0_i32_0 : i32, i32, i32
  }
}

</mosaic_0001>

<llo_original>
// kernel: tpu_custom_call.1
$region0: #{tpu_custom_call.1}
  #allocation0 [shape = 'u32[]', space=smem, size = 0x4, offset = 0x4, fixed_abs, tag = 'smem constant byte address 0x4 - core index']
  #allocation1 [shape = 'u32[144,128]{1,0:T(1,128)}', space=vmem, size = 0x12000, scoped, tag = 'internal scratch']
  %s0 = inlined_call_operand.vmem [shape: f32[2,36,256], index: 0, kind: input, shape index: {}]
  %s1 = inlined_call_operand.vmem [shape: f32[32,36], index: 1, kind: input, shape index: {}]
  %s2 = inlined_call_operand.vmem [shape: f32[32,1], index: 2, kind: input, shape index: {}]
  %s3 = inlined_call_operand.hbm [shape: f32[2,32,256], index: 3, kind: output, shape index: {}]
  %s4 = sld [smem:[#allocation0]]
  $region45: #{tpu_custom_call.1} parent=0
    _
  %s6 = ssub.s32 1, %s4
  %s7 = scalar_select 0, %s6, %s4
  $region1: #{tpu_custom_call.1} parent=0
    #allocation2 [shape = 'u8[65536]{0}', space=vmem, size = 0x10000, scoped, tag = 'output window, operand 0']
    #allocation3 [shape = 's32[2]{0}', space=sflag, size = 0x8, scoped, tag = 'scoped memory for tpu_custom_call.1']
    %8 = vsyncpa [#allocation3], 0
    %s9 = scalar_lea.sflag [#allocation3], 1
    %10 = vsyncpa %s9, 0
    loop: start=0, step=1, limit=4
    $region2: #{tpu_custom_call.1} parent=1 // loop_pre_header
      _
    $region3: #{tpu_custom_call.1} parent=1 // loop_header
      %s12 = sphi 0, %s16
      %p13 = scmp.ge.s32.totalorder %s12, 4
      %s22 = sphi 0, %s24
      %s25 = sphi 0, %s22
      %s26 = sphi 0, %s25
      %s42 = sphi 0, %s26
      %s46 = sphi 0, %s46
      %s48 = sphi 0, %s46
      %s49 = sphi 0, %s48
      %s63 = sphi 0, %s49
      %s67 = sphi 0, %s67
      %s69 = sphi 0, %s67
      %s70 = sphi 0, %s69
      %s84 = sphi 0, %s70
      %s90 = sphi 0, %s92
      %s93 = sphi 0, %s90
      %s94 = sphi 0, %s93
      %s110 = sphi 0, %s94
    $region4: #{tpu_custom_call.1} parent=1 // loop_header_branch
      %15 = sbr.rel (%p13) target = $region8
    $region5: #{tpu_custom_call.1} parent=1 // loop_body
      %s17 = ssub.s32 %s12, 1
      %s18 = ssub.s32 %s12, 2
      %s19 = sadd.s32 %s12, 1
      %s20 = ssub.s32 %s12, %s19
      %p21 = scmp.eq.s32.totalorder %s20, 0
      %s23 = sadd.s32 %s22, 1
      %s24 = scalar_select %p21, %s22, %s23
      %p27 = pneg %p21
      %p28 = scmp.eq.s32.totalorder %s12, 1
      %p29 = por %p27, %p28
      %p30 = scmp.ne.s32.totalorder %s22, %s25
      %p31 = scmp.eq.s32.totalorder %s12, 0
      %p32 = por %p30, %p31
      %p33 = scmp.ne.s32.totalorder %s22, %s25
      %p34 = scmp.eq.s32.totalorder %s17, 1
      %p35 = por %p33, %p34
      %p36 = scmp.ne.s32.totalorder %s25, %s26
      %p37 = scmp.eq.s32.totalorder %s17, 0
      %p38 = por %p36, %p37
      %p39 = scmp.ne.s32.totalorder %s25, %s26
      %p40 = scmp.eq.s32.totalorder %s18, 1
      %p41 = por %p39, %p40
      %p43 = scmp.ne.s32.totalorder %s26, %s42
      %p44 = scmp.eq.s32.totalorder %s18, 0
      %p45 = por %p43, %p44
      %s47 = sadd.s32 %s46, 1
      %p50 = scmp.eq.s32.totalorder %s12, 1
      %p51 = scmp.ne.s32.totalorder %s46, %s48
      %p52 = scmp.eq.s32.totalorder %s12, 0
      %p53 = por %p51, %p52
      %p54 = scmp.ne.s32.totalorder %s46, %s48
      %p55 = scmp.eq.s32.totalorder %s17, 1
      %p56 = por %p54, %p55
      %p57 = scmp.ne.s32.totalorder %s48, %s49
      %p58 = scmp.eq.s32.totalorder %s17, 0
      %p59 = por %p57, %p58
      %p60 = scmp.ne.s32.totalorder %s48, %s49
      %p61 = scmp.eq.s32.totalorder %s18, 1
      %p62 = por %p60, %p61
      %p64 = scmp.ne.s32.totalorder %s49, %s63
      %p65 = scmp.eq.s32.totalorder %s18, 0
      %p66 = por %p64, %p65
      %s68 = sadd.s32 %s67, 1
      %p71 = scmp.eq.s32.totalorder %s12, 1
      %p72 = scmp.ne.s32.totalorder %s67, %s69
      %p73 = scmp.eq.s32.totalorder %s12, 0
      %p74 = por %p72, %p73
      %p75 = scmp.ne.s32.totalorder %s67, %s69
      %p76 = scmp.eq.s32.totalorder %s17, 1
      %p77 = por %p75, %p76
      %p78 = scmp.ne.s32.totalorder %s69, %s70
      %p79 = scmp.eq.s32.totalorder %s17, 0
      %p80 = por %p78, %p79
      %p81 = scmp.ne.s32.totalorder %s69, %s70
      %p82 = scmp.eq.s32.totalorder %s18, 1
      %p83 = por %p81, %p82
      %p85 = scmp.ne.s32.totalorder %s70, %s84
      %p86 = scmp.eq.s32.totalorder %s18, 0
      %p87 = por %p85, %p86
      %s88 = ssub.s32 %s12, %s19
      %p89 = scmp.eq.s32.totalorder %s88, 0
      %s91 = sadd.s32 %s90, 1
      %s92 = scalar_select %p89, %s90, %s91
      %p95 = pneg %p89
      %p96 = scmp.eq.s32.totalorder %s12, 1
      %p97 = por %p95, %p96
      %p98 = scmp.ne.s32.totalorder %s90, %s93
      %p99 = scmp.eq.s32.totalorder %s12, 0
      %p100 = por %p98, %p99
      %p101 = scmp.ne.s32.totalorder %s90, %s93
      %p102 = scmp.eq.s32.totalorder %s17, 1
      %p103 = por %p101, %p102
      %p104 = scmp.ne.s32.totalorder %s93, %s94
      %p105 = scmp.eq.s32.totalorder %s17, 0
      %p106 = por %p104, %p105
      %p107 = scmp.ne.s32.totalorder %s93, %s94
      %p108 = scmp.eq.s32.totalorder %s18, 1
      %p109 = por %p107, %p108
      %p111 = scmp.ne.s32.totalorder %s94, %s110
      %p112 = scmp.eq.s32.totalorder %s18, 0
      %p113 = por %p111, %p112
      %p114 = scmp.le.s32.totalorder 1, %s12
      %p115 = scmp.lt.s32.totalorder %s12, 3
      %p116 = pnand %p114, %p115
      %p117 = pneg %p116
      // Predicated region
      $region9: #{tpu_custom_call.1} parent=5 // pred_check
        _
      $region10: #{tpu_custom_call.1} parent=5 // pred_check_branch
        %119 = sbr.rel (%p116) target = $region12
      $region11: #{tpu_custom_call.1} parent=5 // pred_region
        %s120 = ssub.s32 %s12, 1
        // Predicated region
        $region13: #{tpu_custom_call.1} parent=11 // pred_check
          %p121 = pneg %p59
        $region14: #{tpu_custom_call.1} parent=11 // pred_check_branch
          %123 = sbr.rel (%p121) target = $region16
        $region15: #{tpu_custom_call.1} parent=11 // pred_region
          _
        $region16: #{tpu_custom_call.1} parent=11 // pred_fallthru
          _
        // Predicated region
        $region17: #{tpu_custom_call.1} parent=11 // pred_check
          %p124 = pneg %p80
        $region18: #{tpu_custom_call.1} parent=11 // pred_check_branch
          %126 = sbr.rel (%p124) target = $region20
        $region19: #{tpu_custom_call.1} parent=11 // pred_region
          _
        $region20: #{tpu_custom_call.1} parent=11 // pred_fallthru
          _
      $region12: #{tpu_custom_call.1} parent=5 // pred_fallthru
        _
      %p127 = scmp.lt.s32.totalorder %s12, 2
      // Predicated region
      $region21: #{tpu_custom_call.1} parent=5 // pred_check
        %p128 = pneg %p127
      $region22: #{tpu_custom_call.1} parent=5 // pred_check_branch
        %130 = sbr.rel (%p128) target = $region24
      $region23: #{tpu_custom_call.1} parent=5 // pred_region
        // Predicated region
        $region25: #{tpu_custom_call.1} parent=23 // pred_check
          %p131 = pneg %p32
        $region26: #{tpu_custom_call.1} parent=23 // pred_check_branch
          %133 = sbr.rel (%p131) target = $region28
        $region27: #{tpu_custom_call.1} parent=23 // pred_region
          %p134 = scmp.lt.s32.totalorder %s12, 1
          %s135 = scalar_select %p134, %s12, 1
          %s136 = smul.addr %s135, 10
          %s137 = smul.addr %s136, 8
          %s138 = scalar_lea.vmem %s0, %s137
        $region28: #{tpu_custom_call.1} parent=23 // pred_fallthru
          _
      $region24: #{tpu_custom_call.1} parent=5 // pred_fallthru
        _
      %p139 = scmp.le.s32.totalorder 1, %s12
      %p140 = scmp.lt.s32.totalorder %s12, 3
      %p141 = pnand %p139, %p140
      %p142 = pneg %p141
      // Predicated region
      $region29: #{tpu_custom_call.1} parent=5 // pred_check
        _
      $region30: #{tpu_custom_call.1} parent=5 // pred_check_branch
        %144 = sbr.rel (%p141) target = $region32
      $region31: #{tpu_custom_call.1} parent=5 // pred_region
        %s145 = ssub.s32 %s12, 1
        %p146 = scmp.lt.s32.totalorder %s17, 1
        %s147 = scalar_select %p146, %s17, 1
        %s148 = smul.addr %s147, 10
        %s149 = smul.addr %s148, 8
        %s150 = scalar_lea.vmem %s0, %s149
        %p151 = pneg %p38
        %p152 = pneg %p35
        %p153 = pneg %p59
        %p154 = pneg %p56
        %p155 = pneg %p80
        %p156 = pneg %p77
        %p157 = pneg %p106
        %p158 = pneg %p103
        %s159 = sand.u32 %s93, 1
        %s160 = scalar_lea.sflag [#allocation3], %s159
        %s161 = sand.u32 %s93, 1
        %s162 = smul.addr %s161, 64
        %s163 = scalar_lea.vmem [#allocation2], %s162
        %p164 = scmp.lt.s32.totalorder %s17, 1
        %s165 = scalar_select %p164, %s17, 1
        %s166 = smul.addr %s165, 10
        %s167 = smul.addr %s166, 8
        %s168 = scalar_lea.vmem %s0, %s167
        %v169 = vld [vmem:[%s1] sm:$0xff]
        %v170 = vld [vmem:[%s1 + $0x8] sm:$0xff]
        %v171 = vld [vmem:[%s1 + $0x10] sm:$0xff]
        %v172 = vld [vmem:[%s1 + $0x18] sm:$0xff]
        %v173 = vld [vmem:[%s168] sm:$0xff]
        %v174 = vld [vmem:[%s168 + $0x8] sm:$0xff]
        %v175 = vld [vmem:[%s168 + $0x10] sm:$0xff]
        %v176 = vld [vmem:[%s168 + $0x18] sm:$0xff]
        %v177 = vld [vmem:[%s168 + $0x20] sm:$0xff]
        %v178 = vld [vmem:[%s168 + $0x28] sm:$0xff]
        %v179 = vld [vmem:[%s168 + $0x30] sm:$0xff]
        %v180 = vld [vmem:[%s168 + $0x38] sm:$0xff]
        %v181 = vld [vmem:[%s168 + $0x40] sm:$0xf]
        %v182 = vld [vmem:[%s168 + $0x48] sm:$0xf]
        %v183 = vld [vmem:[%s2] sm:$0xff]
        %v184 = vld [vmem:[%s2 + $0x8] sm:$0xff]
        %v185 = vld [vmem:[%s2 + $0x10] sm:$0xff]
        %v186 = vld [vmem:[%s2 + $0x18] sm:$0xff]
        %188 = vset.pattern.permute.xlu0 0
        %189 = vperm.xlu0 %188, %v183
        %v190 = vpop.permute.xlu0 %189
        %193 = vset.pattern.permute.xlu0 0
        %194 = vperm.xlu0 %193, %v184
        %v195 = vpop.permute.xlu0 %194
        %198 = vset.pattern.permute.xlu0 0
        %199 = vperm.xlu0 %198, %v185
        %v200 = vpop.permute.xlu0 %199
        %203 = vset.pattern.permute.xlu0 0
        %204 = vperm.xlu0 %203, %v186
        %v205 = vpop.permute.xlu0 %204
        %vm207 = vcmask 293888
        %v209 = vsel %vm207, %v169, 0
        %v212 = vsel %vm207, %v170, 0
        %v215 = vsel %vm207, %v171, 0
        %v218 = vsel %vm207, %v172, 0
        %vm220 = vcmask 1043456
        %v222 = vsel %vm220, %v181, 0
        %v225 = vsel %vm220, %v182, 0
        %227 = vmatprep.subr.mxu0 %v174
        %228 = vmatpush1.msra.mxu0 %v173
        %229 = vmatprep.subr.mxu0 %v176
        %230 = vmatpush1.msra.mxu0 %v175
        %231 = vmatprep.subr.mxu0 %v178
        %232 = vmatpush1.msra.mxu0 %v177
        %233 = vmatprep.subr.mxu0 %v180
        %234 = vmatpush1.msra.mxu0 %v179
        %235 = vmatprep.subr.mxu0 %v225
        %236 = vmatpush1.msra.mxu0 %v222
        %237 = vmatprep.subr.mxu0 0.0
        %238 = vmatpush1.msra.mxu0 0.0
        %239 = vmatprep.subr.mxu0 0.0
        %240 = vmatpush1.msra.mxu0 0.0
        %241 = vmatprep.subr.mxu0 0.0
        %242 = vmatpush1.msra.mxu0 0.0
        %243 = vmatprep.subr.mxu0 0.0
        %244 = vmatpush1.msra.mxu0 0.0
        %245 = vmatprep.subr.mxu0 0.0
        %246 = vmatpush1.msra.mxu0 0.0
        %247 = vmatprep.subr.mxu0 0.0
        %248 = vmatpush1.msra.mxu0 0.0
        %249 = vmatprep.subr.mxu0 0.0
        %250 = vmatpush1.msra.mxu0 0.0
        %251 = vmatprep.subr.mxu0 0.0
        %252 = vmatpush1.msra.mxu0 0.0
        %253 = vmatprep.subr.mxu0 0.0
        %254 = vmatpush1.msra.mxu0 0.0
        %255 = vmatprep.subr.mxu0 0.0
        %256 = vmatpush1.msra.mxu0 0.0
        %257 = vmatprep.subr.mxu0 0.0
        %258 = vmatpush1.msra.mxu0 0.0
        %259 = vmatprep.subr.mxu0 0.0
        %260 = vmatpush1.msra.mxu0 0.0
        %261 = vmatprep.subr.mxu0 0.0
        %262 = vmatpush1.msra.mxu0 0.0
        %263 = vmatprep.subr.mxu0 0.0
        %264 = vmatpush1.msra.mxu0 0.0
        %265 = vmatprep.subr.mxu0 0.0
        %266 = vmatpush1.msra.mxu0 0.0
        %267 = vmatprep.subr.mxu0 0.0
        %268 = vmatpush1.msra.mxu0 0.0
        %269 = vmatprep.subr.mxu0 0.0
        %270 = vmatpush1.msra.mxu0 0.0
        %271 = vmatprep.subr.mxu0 0.0
        %272 = vmatpush1.msra.mxu0 0.0
        %273 = vmatprep.subr.mxu0 0.0
        %274 = vmatpush1.msra.mxu0 0.0
        %275 = vmatprep.subr.mxu0 0.0
        %276 = vmatpush1.msra.mxu0 0.0
        %277 = vmatprep.subr.mxu0 0.0
        %278 = vmatpush1.msra.mxu0 0.0
        %279 = vmatprep.subr.mxu0 0.0
        %280 = vmatpush1.msra.mxu0 0.0
        %281 = vmatprep.subr.mxu0 0.0
        %282 = vmatpush1.msra.mxu0 0.0
        %283 = vmatprep.subr.mxu0 0.0
        %284 = vmatpush1.msra.mxu0 0.0
        %285 = vmatprep.subr.mxu0 0.0
        %286 = vmatpush1.msra.mxu0 0.0
        %287 = vmatprep.subr.mxu0 0.0
        %288 = vmatpush1.msra.mxu0 0.0
        %289 = vmatprep.subr.mxu0 0.0
        %290 = vmatpush1.msra.mxu0 0.0
        %291 = vmatprep.mubr.f32.mxu0 0.0
        %292 = vmatmul.mubr.f32.gmra.mrb[0].mxu0 %v209
        %v293 = vpop.f32.mrb[0].mxu0
        %v294 = vadd.f32 %v190, %v293
        %v295 = vpop.f32.mrb[0].mxu0
        %v296 = vadd.f32 %v190, %v295
        %297 = vmatprep.mubr.f32.mxu0 0.0
        %298 = vmatmul.mubr.f32.gmra.mrb[0].mxu0 %v212
        %v299 = vpop.f32.mrb[0].mxu0
        %v300 = vadd.f32 %v195, %v299
        %v301 = vpop.f32.mrb[0].mxu0
        %v302 = vadd.f32 %v195, %v301
        %303 = vmatprep.mubr.f32.mxu0 0.0
        %304 = vmatmul.mubr.f32.gmra.mrb[0].mxu0 %v215
        %v305 = vpop.f32.mrb[0].mxu0
        %v306 = vadd.f32 %v200, %v305
        %v307 = vpop.f32.mrb[0].mxu0
        %v308 = vadd.f32 %v200, %v307
        %309 = vmatprep.mubr.f32.mxu0 0.0
        %310 = vmatmul.mubr.f32.gmra.mrb[0].mxu0 %v218
        %v311 = vpop.f32.mrb[0].mxu0
        %v312 = vadd.f32 %v205, %v311
        %v313 = vpop.f32.mrb[0].mxu0
        %v314 = vadd.f32 %v205, %v313
        %315 = vdwg.mxu0
        %v316 = vmul.f32 %v294, 0.2
        %v317 = vmul.f32 %v296, 0.2
        %v318 = vmul.f32 %v300, 0.2
        %v319 = vmul.f32 %v302, 0.2
        %v320 = vmul.f32 %v306, 0.2
        %v321 = vmul.f32 %v308, 0.2
        %v322 = vmul.f32 %v312, 0.2
        %v323 = vmul.f32 %v314, 0.2
        %v324 = vmax.f32 %v294, %v316
        %v325 = vmax.f32 %v296, %v317
        %v326 = vmax.f32 %v300, %v318
        %v327 = vmax.f32 %v302, %v319
        %v328 = vmax.f32 %v306, %v320
        %v329 = vmax.f32 %v308, %v321
        %v330 = vmax.f32 %v312, %v322
        %v331 = vmax.f32 %v314, %v323
        %332 = vst [vmem:[%s163] sm:$0xff] %v324
        %333 = vst [vmem:[%s163 + $0x8] sm:$0xff] %v325
        %334 = vst [vmem:[%s163 + $0x10] sm:$0xff] %v326
        %335 = vst [vmem:[%s163 + $0x18] sm:$0xff] %v327
        %336 = vst [vmem:[%s163 + $0x20] sm:$0xff] %v328
        %337 = vst [vmem:[%s163 + $0x28] sm:$0xff] %v329
        %338 = vst [vmem:[%s163 + $0x30] sm:$0xff] %v330
        %339 = vst [vmem:[%s163 + $0x38] sm:$0xff] %v331
        %s340 = sand.u32 %s93, 1
        %s341 = scalar_lea.sflag [#allocation3], %s340
        %s342 = sand.u32 %s93, 1
        %s343 = smul.addr %s342, 64
        %s344 = scalar_lea.vmem [#allocation2], %s343
        // Predicated region
        $region33: #{tpu_custom_call.1} parent=31 // pred_check
          %p345 = pneg %p103
        $region34: #{tpu_custom_call.1} parent=31 // pred_check_branch
          %347 = sbr.rel (%p345) target = $region36
        $region35: #{tpu_custom_call.1} parent=31 // pred_region
          %s349 = ssub.s32 1024, 1024
          %350 = vsyncadd %s341, %s349
          %s351 = smul.addr %s17, 8
          %s352 = smul.addr %s351, 128
          %s353 = scalar_lea.hbm %s3, %s352
          %s354 = sshll.u32 %s344, 4
          %s355 = int_to_ptr.vmem [resolvable:$true] %s354
          %360 = dma.vmem_to_hbm [thread:$0]  %s355, 1024, %s353, %s341, 256, 256, 16
        $region36: #{tpu_custom_call.1} parent=31 // pred_fallthru
          _
      $region32: #{tpu_custom_call.1} parent=5 // pred_fallthru
        _
      %p361 = scmp.le.s32.totalorder 2, %s12
      // Predicated region
      $region37: #{tpu_custom_call.1} parent=5 // pred_check
        %p362 = pneg %p361
      $region38: #{tpu_custom_call.1} parent=5 // pred_check_branch
        %364 = sbr.rel (%p362) target = $region40
      $region39: #{tpu_custom_call.1} parent=5 // pred_region
        %s365 = ssub.s32 %s12, 2
        // Predicated region
        $region41: #{tpu_custom_call.1} parent=39 // pred_check
          %p366 = pneg %p109
        $region42: #{tpu_custom_call.1} parent=39 // pred_check_branch
          %368 = sbr.rel (%p366) target = $region44
        $region43: #{tpu_custom_call.1} parent=39 // pred_region
          %s369 = sand.u32 %s94, 1
          %s370 = scalar_lea.sflag [#allocation3], %s369
          %s371 = sand.u32 %s94, 1
          %s372 = smul.addr %s371, 64
          %s373 = scalar_lea.vmem [#allocation2], %s372
          %374 = dma.done %s370, 1024
        $region44: #{tpu_custom_call.1} parent=39 // pred_fallthru
          _
      $region40: #{tpu_custom_call.1} parent=5 // pred_fallthru
        _
    $region6: #{tpu_custom_call.1} parent=1 // loop_footer
      %s16 = sadd.s32 1, %s12
    $region7: #{tpu_custom_call.1} parent=1 // loop_footer_branch
      %11 = sbr.rel target = $region3
    $region8: #{tpu_custom_call.1} parent=1 // loop_exit
      _
    %375 = vsyncpa [#allocation3], 1
    %s376 = scalar_lea.sflag [#allocation3], 1
    %377 = vsyncpa %s376, 1

</llo_original>
